<compile_context>
chip_gen: v5e
topology: v5e:2x2
jax: 0.10.0
libtpu: 0.0.40
codegen_flags: <defaults>
</compile_context>

<pallas_src>
import jax
import jax.numpy as jnp
from jax.experimental import pallas as pl
from jax.experimental.pallas import tpu as pltpu


def _round_up(x: int, m: int) -> int:
    return ((x + m - 1) // m) * m


def _largest_divisor_multiple(extent: int, unit: int, cap: int) -> int:
    """Largest d such that d divides `extent`, d % unit == 0, and d <= cap.

    Assumes extent % unit == 0 and cap >= unit.
    """
    n = extent // unit
    cap_n = max(1, cap // unit)
    best = 1
    i = 1
    while i * i <= n:
        if n % i == 0:
            for d in (i, n // i):
                if d <= cap_n and d > best:
                    best = d
        i += 1
    return best * unit


def _default_budgets():
    """Generation-aware (tile_budget_bytes, vmem_limit_bytes)."""
    kind = ""
    try:
        kind = jax.devices()[0].device_kind.lower()
    except Exception:
        pass
    if "v5" in kind:
        # 0.82 TB/s HBM: 4 MiB tiles keep per-step overhead ~3-4%.
        return 4 << 20, 64 << 20
    if "v6" in kind:
        # 1.4 TB/s HBM, 128 MiB physical VMEM: 8 MiB tiles, 4x tile = 32 MiB.
        return 8 << 20, 48 << 20
    if "v7" in kind:
        # 3.2 TB/s HBM but only 64 MiB VMEM/TC: 6 MiB tiles, 4x tile = 24 MiB.
        return 6 << 20, 40 << 20
    # Unknown / fallback: conservative.
    return 4 << 20, 40 << 20


def _throm_kernel(t_ref, m_ref, o_ref):
    # t_ref: (TM, 1)  per-row thresholds (VMEM), broadcast along lanes.
    # m_ref / o_ref: (TM, TN) lane-dense tiles (VMEM).
    o_ref[...] = jnp.maximum(m_ref[...] - t_ref[...], jnp.zeros((), m_ref.dtype))


def throm_forward(m, thro, *, tile_budget_bytes=None, vmem_limit_bytes=None,
                  donate_input=False):
    """m: (B, C, H, W); thro: (1, C, 1, 1) -> relu(m - thro), shape (B, C, H, W)."""
    B, C, H, W = m.shape
    R, N = B * C, H * W
    dtype = m.dtype
    itemsize = jnp.dtype(dtype).itemsize

    if tile_budget_bytes is None or vmem_limit_bytes is None:
        tb, vl = _default_budgets()
        tile_budget_bytes = tile_budget_bytes or tb
        vmem_limit_bytes = vmem_limit_bytes or vl

    # Flatten to a lane-dense 2-D slab (free reshape for contiguous NCHW).
    m2 = m.reshape(R, N)
    # Per-row threshold column: (B*C, 1).
    t_rows = jnp.broadcast_to(thro.reshape(1, C), (B, C)).reshape(R, 1).astype(dtype)

    sub = max(8, 32 // itemsize)   # native sublane packing (8 f32, 16 bf16, 32 i8)
    lane = 128

    # --- lane (last) axis tiling: avoid padding whenever possible ----------
    tn_cap = max(lane, (tile_budget_bytes // (sub * itemsize)) // lane * lane)
    if N % lane == 0:
        N_pad = N
        tn = _largest_divisor_multiple(N, lane, tn_cap)
    elif N * itemsize * sub <= tile_budget_bytes:
        # Full-extent lane block (legal per the (8,128)-or-full-extent rule).
        N_pad, tn = N, N
    else:
        N_pad = _round_up(N, lane)
        tn = _largest_divisor_multiple(N_pad, lane, tn_cap)

    # --- row (sublane) axis tiling ------------------------------------------
    tm_cap = max(sub, (tile_budget_bytes // (tn * itemsize)) // sub * sub)
    if R % sub == 0:
        R_pad = R
        tm = _largest_divisor_multiple(R, sub, tm_cap)
    elif R <= tm_cap:
        R_pad, tm = R, R
    else:
        R_pad = _round_up(R, sub)
        tm = _largest_divisor_multiple(R_pad, sub, tm_cap)

    # v7x shards "parallel" grid axes over 2 TensorCores: if the whole array
    # would be a single non-trivial grid step, split it so both TCs get work.
    if (R_pad // tm) * (N_pad // tn) == 1 and tm * tn * itemsize >= (1 << 20):
        if tm % (2 * sub) == 0:
            tm //= 2
        elif tn % (2 * lane) == 0:
            tn //= 2

    # Padding only as a last resort (non-(8,128)-aligned extents too large for
    # a full-extent block). Padded rows/cols are sliced away before returning.
    padded = (R_pad, N_pad) != (R, N)
    if padded:
        m2 = jnp.pad(m2, ((0, R_pad - R), (0, N_pad - N)))
        t_rows = jnp.pad(t_rows, ((0, R_pad - R), (0, 0)))

    grid = (R_pad // tm, N_pad // tn)

    out2 = pl.pallas_call(
        _throm_kernel,
        out_shape=jax.ShapeDtypeStruct((R_pad, N_pad), dtype),
        grid=grid,
        in_specs=[
            # per-row thresholds: (TM, 1) column block, reused along the lane axis
            pl.BlockSpec((tm, 1), lambda i, j: (i, 0)),
            # data tile: (TM, TN) lane-dense block
            pl.BlockSpec((tm, tn), lambda i, j: (i, j)),
        ],
        out_specs=pl.BlockSpec((tm, tn), lambda i, j: (i, j)),
        compiler_params=pltpu.CompilerParams(
            dimension_semantics=("parallel", "parallel"),
            vmem_limit_bytes=vmem_limit_bytes,
        ),
        # Optional: donate the (flattened) input buffer to the output when the
        # caller no longer needs M, saving a full-size HBM allocation.
        input_output_aliases=({1: 0} if donate_input else {}),
    )(t_rows, m2)

    if padded:
        out2 = out2[:R, :N]
    return out2.reshape(B, C, H, W)


if __name__ == "__main__":
    B, C, H, W = 2, 4, 16, 16  # num_M = C = 4

    key = jax.random.PRNGKey(0)
    M = jax.random.normal(key, (B, C, H, W), dtype=jnp.float32)

    # Matches nn.Parameter(torch.full([1, C, 1, 1], 0.5)).
    Thro = jnp.full((1, C, 1, 1), 0.5, dtype=jnp.float32)

    out = throm_forward(M, Thro)
    out = jax.block_until_ready(out)

    # Reference check (plain JAX) to make sure semantics match the module.
    ref = jnp.maximum(M - Thro, 0.0)
    assert out.shape == (B, C, H, W)
    assert jnp.allclose(out, ref, atol=1e-6), "mismatch vs reference"

    print("KERNEL_OK")
</pallas_src>

<mosaic_0001>
module attributes {stable_mosaic.version = 11 : i64} {
  func.func @_throm_kernel(%arg0: i32, %arg1: i32, %arg2: memref<8x1xf32, #tpu.memory_space<vmem>>, %arg3: memref<8x256xf32, #tpu.memory_space<vmem>>, %arg4: memref<8x256xf32, #tpu.memory_space<vmem>>) attributes {dimension_semantics = [#tpu.dimension_semantics<parallel>, #tpu.dimension_semantics<parallel>], iteration_bounds = array<i64: 1, 1>, scalar_prefetch = 0 : i64, scratch_operands = 0 : i64, tpu.core_type = #tpu.core_type<tc>, window_params = [{transform_indices = @transform_0, window_bounds = array<i64: 8, 1>}, {transform_indices = @transform_1, window_bounds = array<i64: 8, 256>}, {transform_indices = @transform_2, window_bounds = array<i64: 8, 256>}]} {
    %c0 = arith.constant 0 : index
    %c0_0 = arith.constant 0 : index
    %0 = vector.load %arg3[%c0, %c0_0] : memref<8x256xf32, #tpu.memory_space<vmem>>, vector<8x256xf32>
    %c0_1 = arith.constant 0 : index
    %c0_2 = arith.constant 0 : index
    %1 = vector.load %arg2[%c0_1, %c0_2] : memref<8x1xf32, #tpu.memory_space<vmem>>, vector<8x1xf32>
    %2 = vector.broadcast %1 : vector<8x1xf32> to vector<8x256xf32>
    %3 = arith.subf %0, %2 : vector<8x256xf32>
    %cst = arith.constant 0.000000e+00 : f32
    %4 = vector.broadcast %cst : f32 to vector<8x256xf32>
    %5 = arith.maximumf %3, %4 : vector<8x256xf32>
    %c0_3 = arith.constant 0 : index
    %c0_4 = arith.constant 0 : index
    %6 = vector.load %arg4[%c0_3, %c0_4] : memref<8x256xf32, #tpu.memory_space<vmem>>, vector<8x256xf32>
    tpu.vector_store %arg4[%c0_3, %c0_4], %5 {strides = array<i32>} : memref<8x256xf32, #tpu.memory_space<vmem>>, vector<8x256xf32>,
    return
  }
  func.func @transform_0(%arg0: i32, %arg1: i32) -> (i32, i32) {
    %c0_i32 = arith.constant 0 : i32
    %c0_i32_0 = arith.constant 0 : i32
    return %arg0, %c0_i32 : i32, i32
  }
  func.func @transform_1(%arg0: i32, %arg1: i32) -> (i32, i32) {
    %c0_i32 = arith.constant 0 : i32
    return %arg0, %arg1 : i32, i32
  }
  func.func @transform_2(%arg0: i32, %arg1: i32) -> (i32, i32) {
    %c0_i32 = arith.constant 0 : i32
    return %arg0, %arg1 : i32, i32
  }
}

</mosaic_0001>

<llo_original>
// kernel: tpu_custom_call.1
$region0: #{tpu_custom_call.1}
  #allocation0 [shape = 'u32[]', space=smem, size = 0x4, offset = 0x4, fixed_abs, tag = 'smem constant byte address 0x4 - core index']
  #allocation1 [shape = 'u32[72,128]{1,0:T(1,128)}', space=vmem, size = 0x9000, scoped, tag = 'internal scratch']
  %s0 = inlined_call_operand.vmem [shape: f32[8,1], index: 0, kind: input, shape index: {}]
  %s1 = inlined_call_operand.hbm [shape: f32[8,256], index: 1, kind: input, shape index: {}]
  %s2 = inlined_call_operand.hbm [shape: f32[8,256], index: 2, kind: output, shape index: {}]
  %s3 = sld [smem:[#allocation0]]
  $region22: #{tpu_custom_call.1} parent=0
    _
  %s5 = ssub.s32 1, %s3
  %s6 = scalar_select 0, %s5, %s3
  $region1: #{tpu_custom_call.1} parent=0
    #allocation2 [shape = 'u8[8192]{0}', space=vmem, size = 0x2000, scoped, tag = 'input window, operand 1, single buffered']
    #allocation3 [shape = 's32[1]{0}', space=sflag, size = 0x4, scoped, tag = 'scoped memory for tpu_custom_call.1']
    #allocation4 [shape = 's32[1]{0}', space=sflag, size = 0x4, scoped, tag = 'scoped memory for tpu_custom_call.1']
    #allocation5 [shape = 'u8[8192]{0}', space=vmem, size = 0x2000, scoped, tag = 'output window, operand 0, single buffered']
    %7 = vsyncpa [#allocation3], 0
    %8 = vsyncpa [#allocation4], 0
    // Predicated region
    $region2: #{tpu_custom_call.1} parent=1 // pred_check
      _
    $region3: #{tpu_custom_call.1} parent=1 // pred_check_branch
      %10 = sbr.rel (0) target = $region5
    $region4: #{tpu_custom_call.1} parent=1 // pred_region
      _
    $region5: #{tpu_custom_call.1} parent=1 // pred_fallthru
      _
    // Predicated region
    $region6: #{tpu_custom_call.1} parent=1 // pred_check
      _
    $region7: #{tpu_custom_call.1} parent=1 // pred_check_branch
      %12 = sbr.rel (0) target = $region9
    $region8: #{tpu_custom_call.1} parent=1 // pred_region
      %14 = vsyncadd [#allocation3], 0
      %s16 = sshll.u32 %s1, 4
      %s17 = int_to_ptr.hbm [resolvable:$true] %s16
      %s18 = sshll.u32 [#allocation2], 4
      %s19 = int_to_ptr.vmem [resolvable:$true] %s18
      %21 = dma.hbm_to_vmem [thread:$0]  %s17, 256, %s19, [#allocation3]
    $region9: #{tpu_custom_call.1} parent=1 // pred_fallthru
      _
    // Predicated region
    $region10: #{tpu_custom_call.1} parent=1 // pred_check
      _
    $region11: #{tpu_custom_call.1} parent=1 // pred_check_branch
      %23 = sbr.rel (0) target = $region13
    $region12: #{tpu_custom_call.1} parent=1 // pred_region
      %25 = dma.done [#allocation3], 256
    $region13: #{tpu_custom_call.1} parent=1 // pred_fallthru
      _
    %v26 = vld [vmem:[#allocation2] sm:$0xff]
    %v27 = vld [vmem:[#allocation2 + $0x8] sm:$0xff]
    %v28 = vld [vmem:[%s0] sm:$0xff]
    %30 = vset.pattern.permute.xlu0 0
    %31 = vperm.xlu0 %30, %v28
    %v32 = vpop.permute.xlu0 %31
    %v34 = vsub.f32 %v26, %v32
    %v35 = vsub.f32 %v27, %v32
    %v36 = vmax.f32 %v34, 0.0
    %v37 = vmax.f32 %v35, 0.0
    %38 = vst [vmem:[#allocation5] sm:$0xff] %v36
    %39 = vst [vmem:[#allocation5 + $0x8] sm:$0xff] %v37
    // Predicated region
    $region14: #{tpu_custom_call.1} parent=1 // pred_check
      _
    $region15: #{tpu_custom_call.1} parent=1 // pred_check_branch
      %41 = sbr.rel (0) target = $region17
    $region16: #{tpu_custom_call.1} parent=1 // pred_region
      %43 = vsyncadd [#allocation4], 0
      %s45 = sshll.u32 [#allocation5], 4
      %s46 = int_to_ptr.vmem [resolvable:$true] %s45
      %s47 = sshll.u32 %s2, 4
      %s48 = int_to_ptr.hbm [resolvable:$true] %s47
      %50 = dma.vmem_to_hbm [thread:$0]  %s46, 256, %s48, [#allocation4]
    $region17: #{tpu_custom_call.1} parent=1 // pred_fallthru
      _
    // Predicated region
    $region18: #{tpu_custom_call.1} parent=1 // pred_check
      _
    $region19: #{tpu_custom_call.1} parent=1 // pred_check_branch
      %52 = sbr.rel (0) target = $region21
    $region20: #{tpu_custom_call.1} parent=1 // pred_region
      %54 = dma.done [#allocation4], 256
    $region21: #{tpu_custom_call.1} parent=1 // pred_fallthru
      _
    %55 = vsyncpa [#allocation3], 1
    %56 = vsyncpa [#allocation4], 1

</llo_original>
